<compile_context>
chip_gen: v6e
topology: v6e:2x2x1
jax: 0.10.0
libtpu: 0.0.40
codegen_flags: <defaults>
</compile_context>

<pallas_src>
import functools

import jax
import jax.numpy as jnp
from jax.experimental import pallas as pl
from jax.experimental.pallas import tpu as pltpu

HIDDEN = 64
PAD = 128          # lane width: every layer is padded to 128-in / 128-out


def _round_up(x, m):
    return ((x + m - 1) // m) * m


def _cdiv(x, m):
    return (x + m - 1) // m


def _mlp_kernel(x_ref, w_ref, b_ref, o_ref, *, input_dim, output_dim,
                n_layers, compute_dtype):
    """Fused n-layer MLP on one [tb, input_dim] batch tile.

    x_ref : [tb, input_dim]         f32 activation tile (streamed per step)
    w_ref : [n_layers, PAD, PAD]    resident weights, compute_dtype, [in, out]
    b_ref : [n_layers, PAD]         resident biases, f32
    o_ref : [tb, output_dim]        exact-width f32 output block
    """
    # Layer 0: only the first `input_dim` rows of the padded W matter.
    h = x_ref[...].astype(compute_dtype)
    z = jnp.dot(h, w_ref[0, :input_dim, :],
                preferred_element_type=jnp.float32)
    h = jnp.maximum(z + b_ref[0:1, :], 0.0)

    # Hidden layers 1 .. n-2: full 128x128 matmuls; bias add / ReLU in f32.
    for l in range(1, n_layers - 1):
        z = jnp.dot(h.astype(compute_dtype), w_ref[l],
                    preferred_element_type=jnp.float32)
        h = jnp.maximum(z + b_ref[l:l + 1, :], 0.0)

    # Final layer: Linear, no activation.  Only the first `output_dim` lanes
    # are meaningful -> store the narrow block directly so HBM writeback is
    # exactly the useful bytes (no [tb, 128] slab, no wrapper slice copy).
    z = jnp.dot(h.astype(compute_dtype), w_ref[n_layers - 1],
                preferred_element_type=jnp.float32)
    z = z + b_ref[n_layers - 1:n_layers, :]
    o_ref[...] = z[:, :output_dim].astype(o_ref.dtype)


def pack_params(params, compute_dtype=jnp.float32, pad=PAD):
    """Pack PyTorch-convention layers (W[out,in], b[out]) into two slabs.

    Call ONCE (hoisted out of the hot path). Returns:
      w_slab [n_layers, pad, pad]  zero-padded, stored transposed ([in, out])
      b_slab [n_layers, pad]       f32, zero-padded

    compute_dtype=jnp.bfloat16 is the recommended fast path on v5e/v6e/v7x
    (MXU is bf16-native); f32 keeps exact module semantics.
    """
    n = len(params)
    assert n >= 2, "kernel assumes at least 2 linear layers"
    w_slab = jnp.zeros((n, pad, pad), dtype=compute_dtype)
    b_slab = jnp.zeros((n, pad), dtype=jnp.float32)
    for l, (W, b) in enumerate(params):
        Wt = jnp.asarray(W, jnp.float32).T        # [in, out]
        in_d, out_d = Wt.shape
        assert in_d <= pad and out_d <= pad
        w_slab = w_slab.at[l, :in_d, :out_d].set(Wt.astype(compute_dtype))
        b_slab = b_slab.at[l, :out_d].set(jnp.asarray(b, jnp.float32))
    return w_slab, b_slab


def fullnet_nn_forward(x, w_slab, b_slab, *, input_dim, output_dim, tb=512):
    """FullNet('nn') forward: 4 x (Linear + ReLU) + Linear.

    `tb` is the target batch-tile size (rows per grid step).  It is rounded
    to a multiple of 8 sublanes and capped so the grid keeps >= 2 steps
    (lets the "parallel" batch axis shard across both TensorCores on v7x).
    """
    B = x.shape[0]
    n_layers, pad, _ = w_slab.shape
    assert n_layers >= 2, "kernel assumes at least 2 linear layers"
    assert 1 <= input_dim <= pad and 1 <= output_dim <= pad
    assert x.shape[1] == input_dim
    compute_dtype = w_slab.dtype

    # --- batch-tile selection --------------------------------------------
    half = _round_up(_cdiv(B, 2), 8)             # keep >= 2 grid steps
    tb = max(8, min(_round_up(tb, 8), half))
    n_steps = _cdiv(B, tb)                       # ragged tail -> partial block

    # --- block specs -------------------------------------------------------
    # Activations stream tile-by-tile; if the caller forces small tiles with
    # several steps, deepen the input pipeline so DMA latency stays hidden
    # behind the (tiny) per-step compute.
    if tb <= 256 and n_steps >= 3:
        x_spec = pl.BlockSpec((tb, input_dim), lambda i: (i, 0),
                              pipeline_mode=pl.Buffered(3))
    else:
        x_spec = pl.BlockSpec((tb, input_dim), lambda i: (i, 0))

    kernel = functools.partial(
        _mlp_kernel, input_dim=input_dim, output_dim=output_dim,
        n_layers=n_layers, compute_dtype=compute_dtype)

    return pl.pallas_call(
        kernel,
        out_shape=jax.ShapeDtypeStruct((B, output_dim), jnp.float32),
        grid_spec=pltpu.PrefetchScalarGridSpec(
            num_scalar_prefetch=0,
            grid=(n_steps,),
            in_specs=[
                x_spec,
                # Weights / biases: constant block index -> DMA'd once,
                # resident in VMEM for every grid step.
                pl.BlockSpec((n_layers, pad, pad), lambda i: (0, 0, 0)),
                pl.BlockSpec((n_layers, pad), lambda i: (0, 0)),
            ],
            out_specs=pl.BlockSpec((tb, output_dim), lambda i: (i, 0)),
        ),
        compiler_params=pltpu.CompilerParams(
            # Batch axis is embarrassingly parallel -> sharded across the two
            # TensorCores on v7x; harmless on single-TC v5e/v6e.
            dimension_semantics=("parallel",),
        ),
    )(x, w_slab, b_slab)


def _init_params(key, input_dim, output_dim, hidden=HIDDEN):
    """Deterministic init of the 5 Linear layers of FullNet('nn')."""
    dims = [(hidden, input_dim), (hidden, hidden), (hidden, hidden),
            (hidden, hidden), (output_dim, hidden)]
    params = []
    for (out_d, in_d) in dims:
        key, kw, kb = jax.random.split(key, 3)
        bound = 1.0 / jnp.sqrt(in_d)
        W = jax.random.uniform(kw, (out_d, in_d), jnp.float32, -bound, bound)
        b = jax.random.uniform(kb, (out_d,), jnp.float32, -bound, bound)
        params.append((W, b))
    return params


def _reference_forward(x, params, compute_dtype=jnp.float32):
    """Pure-JAX reference matching the kernel numerics (f32 accumulation)."""
    h = x
    for l, (W, b) in enumerate(params):
        Wc = jnp.asarray(W, jnp.float32).astype(compute_dtype)
        z = jnp.dot(h.astype(compute_dtype), Wc.T,
                    preferred_element_type=jnp.float32) + jnp.asarray(b, jnp.float32)
        h = z if l == len(params) - 1 else jnp.maximum(z, 0.0)
    return h


if __name__ == "__main__":
    key = jax.random.PRNGKey(0)
    input_dim, output_dim = 32, 16

    key, kp = jax.random.split(key)
    params = _init_params(kp, input_dim, output_dim)

    # Packed ONCE, outside the hot path.
    w32, b32 = pack_params(params, jnp.float32)      # exact f32 semantics
    wbf, bbf = pack_params(params, jnp.bfloat16)     # recommended fast path

    fwd = jax.jit(functools.partial(
        fullnet_nn_forward, input_dim=input_dim, output_dim=output_dim))
    fwd_small_tile = jax.jit(functools.partial(
        fullnet_nn_forward, input_dim=input_dim, output_dim=output_dim, tb=128))

    # --- 1) small-shape demo: batch=16, f32 weights, 2 grid steps ---------
    key, kx = jax.random.split(key)
    x16 = jax.random.normal(kx, (16, input_dim), jnp.float32)
    out16 = jax.block_until_ready(fwd(x16, w32, b32))
    ref16 = _reference_forward(x16, params)
    assert out16.shape == (16, output_dim)
    assert jnp.allclose(out16, ref16, atol=1e-4, rtol=1e-4)

    # --- 2) ragged batch (partial last block), bf16 weights ----------------
    key, kx = jax.random.split(key)
    xr = jax.random.normal(kx, (1000, input_dim), jnp.float32)
    out_r = jax.block_until_ready(fwd(xr, wbf, bbf))
    ref_r = _reference_forward(xr, params, jnp.bfloat16)
    assert out_r.shape == (1000, output_dim)
    assert jnp.allclose(out_r, ref_r, atol=5e-3, rtol=5e-3)

    # --- 3) forced small tile -> 3-deep activation pipeline path -----------
    key, kx = jax.random.split(key)
    xs = jax.random.normal(kx, (1024, input_dim), jnp.float32)
    out_s = jax.block_until_ready(fwd_small_tile(xs, w32, b32))
    ref_s = _reference_forward(xs, params)
    assert out_s.shape == (1024, output_dim)
    assert jnp.allclose(out_s, ref_s, atol=1e-4, rtol=1e-4)

    print("KERNEL_OK")
</pallas_src>

<mosaic_0001>
module attributes {stable_mosaic.version = 11 : i64} {
  func.func @_mlp_kernel(%arg0: i32, %arg1: memref<8x32xf32, #tpu.memory_space<vmem>>, %arg2: memref<5x128x128xf32, #tpu.memory_space<vmem>>, %arg3: memref<5x128xf32, #tpu.memory_space<vmem>>, %arg4: memref<8x16xf32, #tpu.memory_space<vmem>>) attributes {dimension_semantics = [#tpu.dimension_semantics<parallel>], iteration_bounds = array<i64: 2>, scalar_prefetch = 0 : i64, scratch_operands = 0 : i64, tpu.core_type = #tpu.core_type<tc>, window_params = [{transform_indices = @transform_0, window_bounds = array<i64: 8, 32>}, {pipeline_mode = #tpu.pipeline_mode<synchronous>, transform_indices = @transform_1, window_bounds = array<i64: 5, 128, 128>}, {pipeline_mode = #tpu.pipeline_mode<synchronous>, transform_indices = @transform_2, window_bounds = array<i64: 5, 128>}, {transform_indices = @transform_3, window_bounds = array<i64: 8, 16>}]} {
    %c0 = arith.constant 0 : index
    %c0_0 = arith.constant 0 : index
    %0 = vector.load %arg1[%c0, %c0_0] : memref<8x32xf32, #tpu.memory_space<vmem>>, vector<8x32xf32>
    %c0_1 = arith.constant 0 : index
    %c0_2 = arith.constant 0 : index
    %c0_3 = arith.constant 0 : index
    %1 = vector.load %arg2[%c0_1, %c0_2, %c0_3] : memref<5x128x128xf32, #tpu.memory_space<vmem>>, vector<1x32x128xf32>
    %2 = vector.shape_cast %1 : vector<1x32x128xf32> to vector<32x128xf32>
    %cst = arith.constant dense<0.000000e+00> : vector<8x128xf32>
    %3 = tpu.matmul %0, %2, %cst {dimension_numbers = #tpu.dot_dimension_numbers<[1], [0], [0], [1], [0, 0, 1, 1], [], []>} : vector<8x32xf32>, vector<32x128xf32>, vector<8x128xf32> -> vector<8x128xf32>
    %c0_4 = arith.constant 0 : index
    %c0_5 = arith.constant 0 : index
    %4 = vector.load %arg3[%c0_4, %c0_5] : memref<5x128xf32, #tpu.memory_space<vmem>>, vector<1x128xf32>
    %5 = vector.broadcast %4 : vector<1x128xf32> to vector<8x128xf32>
    %6 = arith.addf %3, %5 : vector<8x128xf32>
    %cst_6 = arith.constant 0.000000e+00 : f32
    %7 = vector.broadcast %cst_6 : f32 to vector<8x128xf32>
    %8 = arith.maximumf %6, %7 : vector<8x128xf32>
    %c1 = arith.constant 1 : index
    %c0_7 = arith.constant 0 : index
    %c0_8 = arith.constant 0 : index
    %9 = vector.load %arg2[%c1, %c0_7, %c0_8] : memref<5x128x128xf32, #tpu.memory_space<vmem>>, vector<1x128x128xf32>
    %10 = vector.shape_cast %9 : vector<1x128x128xf32> to vector<128x128xf32>
    %cst_9 = arith.constant dense<0.000000e+00> : vector<8x128xf32>
    %11 = tpu.matmul %8, %10, %cst_9 {dimension_numbers = #tpu.dot_dimension_numbers<[1], [0], [0], [1], [0, 0, 1, 1], [], []>} : vector<8x128xf32>, vector<128x128xf32>, vector<8x128xf32> -> vector<8x128xf32>
    %c1_10 = arith.constant 1 : index
    %c0_11 = arith.constant 0 : index
    %12 = vector.load %arg3[%c1_10, %c0_11] : memref<5x128xf32, #tpu.memory_space<vmem>>, vector<1x128xf32>
    %13 = vector.broadcast %12 : vector<1x128xf32> to vector<8x128xf32>
    %14 = arith.addf %11, %13 : vector<8x128xf32>
    %cst_12 = arith.constant 0.000000e+00 : f32
    %15 = vector.broadcast %cst_12 : f32 to vector<8x128xf32>
    %16 = arith.maximumf %14, %15 : vector<8x128xf32>
    %c2 = arith.constant 2 : index
    %c0_13 = arith.constant 0 : index
    %c0_14 = arith.constant 0 : index
    %17 = vector.load %arg2[%c2, %c0_13, %c0_14] : memref<5x128x128xf32, #tpu.memory_space<vmem>>, vector<1x128x128xf32>
    %18 = vector.shape_cast %17 : vector<1x128x128xf32> to vector<128x128xf32>
    %cst_15 = arith.constant dense<0.000000e+00> : vector<8x128xf32>
    %19 = tpu.matmul %16, %18, %cst_15 {dimension_numbers = #tpu.dot_dimension_numbers<[1], [0], [0], [1], [0, 0, 1, 1], [], []>} : vector<8x128xf32>, vector<128x128xf32>, vector<8x128xf32> -> vector<8x128xf32>
    %c2_16 = arith.constant 2 : index
    %c0_17 = arith.constant 0 : index
    %20 = vector.load %arg3[%c2_16, %c0_17] : memref<5x128xf32, #tpu.memory_space<vmem>>, vector<1x128xf32>
    %21 = vector.broadcast %20 : vector<1x128xf32> to vector<8x128xf32>
    %22 = arith.addf %19, %21 : vector<8x128xf32>
    %cst_18 = arith.constant 0.000000e+00 : f32
    %23 = vector.broadcast %cst_18 : f32 to vector<8x128xf32>
    %24 = arith.maximumf %22, %23 : vector<8x128xf32>
    %c3 = arith.constant 3 : index
    %c0_19 = arith.constant 0 : index
    %c0_20 = arith.constant 0 : index
    %25 = vector.load %arg2[%c3, %c0_19, %c0_20] : memref<5x128x128xf32, #tpu.memory_space<vmem>>, vector<1x128x128xf32>
    %26 = vector.shape_cast %25 : vector<1x128x128xf32> to vector<128x128xf32>
    %cst_21 = arith.constant dense<0.000000e+00> : vector<8x128xf32>
    %27 = tpu.matmul %24, %26, %cst_21 {dimension_numbers = #tpu.dot_dimension_numbers<[1], [0], [0], [1], [0, 0, 1, 1], [], []>} : vector<8x128xf32>, vector<128x128xf32>, vector<8x128xf32> -> vector<8x128xf32>
    %c3_22 = arith.constant 3 : index
    %c0_23 = arith.constant 0 : index
    %28 = vector.load %arg3[%c3_22, %c0_23] : memref<5x128xf32, #tpu.memory_space<vmem>>, vector<1x128xf32>
    %29 = vector.broadcast %28 : vector<1x128xf32> to vector<8x128xf32>
    %30 = arith.addf %27, %29 : vector<8x128xf32>
    %cst_24 = arith.constant 0.000000e+00 : f32
    %31 = vector.broadcast %cst_24 : f32 to vector<8x128xf32>
    %32 = arith.maximumf %30, %31 : vector<8x128xf32>
    %c4 = arith.constant 4 : index
    %c0_25 = arith.constant 0 : index
    %c0_26 = arith.constant 0 : index
    %33 = vector.load %arg2[%c4, %c0_25, %c0_26] : memref<5x128x128xf32, #tpu.memory_space<vmem>>, vector<1x128x128xf32>
    %34 = vector.shape_cast %33 : vector<1x128x128xf32> to vector<128x128xf32>
    %cst_27 = arith.constant dense<0.000000e+00> : vector<8x128xf32>
    %35 = tpu.matmul %32, %34, %cst_27 {dimension_numbers = #tpu.dot_dimension_numbers<[1], [0], [0], [1], [0, 0, 1, 1], [], []>} : vector<8x128xf32>, vector<128x128xf32>, vector<8x128xf32> -> vector<8x128xf32>
    %c4_28 = arith.constant 4 : index
    %c0_29 = arith.constant 0 : index
    %36 = vector.load %arg3[%c4_28, %c0_29] : memref<5x128xf32, #tpu.memory_space<vmem>>, vector<1x128xf32>
    %37 = vector.broadcast %36 : vector<1x128xf32> to vector<8x128xf32>
    %38 = arith.addf %35, %37 : vector<8x128xf32>
    %39 = vector.extract_strided_slice %38 {offsets = [0, 0], sizes = [8, 16], strides = [1, 1]} : vector<8x128xf32> to vector<8x16xf32>
    %c0_30 = arith.constant 0 : index
    %c0_31 = arith.constant 0 : index
    %40 = vector.load %arg4[%c0_30, %c0_31] : memref<8x16xf32, #tpu.memory_space<vmem>>, vector<8x16xf32>
    tpu.vector_store %arg4[%c0_30, %c0_31], %39 {strides = array<i32>} : memref<8x16xf32, #tpu.memory_space<vmem>>, vector<8x16xf32>,
    return
  }
  func.func @transform_0(%arg0: i32) -> (i32, i32) {
    %c0_i32 = arith.constant 0 : i32
    %c0_i32_0 = arith.constant 0 : i32
    return %arg0, %c0_i32 : i32, i32
  }
  func.func @transform_1(%arg0: i32) -> (i32, i32, i32) {
    %c0_i32 = arith.constant 0 : i32
    %c0_i32_0 = arith.constant 0 : i32
    %c0_i32_1 = arith.constant 0 : i32
    %c0_i32_2 = arith.constant 0 : i32
    return %c0_i32, %c0_i32_0, %c0_i32_1 : i32, i32, i32
  }
  func.func @transform_2(%arg0: i32) -> (i32, i32) {
    %c0_i32 = arith.constant 0 : i32
    %c0_i32_0 = arith.constant 0 : i32
    %c0_i32_1 = arith.constant 0 : i32
    return %c0_i32, %c0_i32_0 : i32, i32
  }
  func.func @transform_3(%arg0: i32) -> (i32, i32) {
    %c0_i32 = arith.constant 0 : i32
    %c0_i32_0 = arith.constant 0 : i32
    return %arg0, %c0_i32 : i32, i32
  }
}

</mosaic_0001>

<llo_original>
// kernel: fullnet_nn_forward.1
$region0: #{fullnet_nn_forward.1}
  #allocation0 [shape = 'u32[]', space=smem, size = 0x4, offset = 0x4, fixed_abs, tag = 'smem constant byte address 0x4 - core index']
  #allocation1 [shape = 'u32[144,128]{1,0:T(1,128)}', space=vmem, size = 0x12000, scoped, tag = 'internal scratch']
  %s0 = inlined_call_operand.hbm [shape: f32[16,32], index: 0, kind: input, shape index: {}]
  %s1 = inlined_call_operand.hbm [shape: f32[5,128,128], index: 1, kind: input, shape index: {}]
  %s2 = inlined_call_operand.hbm [shape: f32[5,128], index: 2, kind: input, shape index: {}]
  %s3 = inlined_call_operand.hbm [shape: f32[16,16], index: 3, kind: output, shape index: {}]
  %s4 = sld [smem:[#allocation0]]
  $region57: #{fullnet_nn_forward.1} parent=0
    _
  %s6 = ssub.s32 1, %s4
  %s7 = scalar_select 0, %s6, %s4
  $region1: #{fullnet_nn_forward.1} parent=0
    #allocation2 [shape = 'u8[8192]{0}', space=vmem, size = 0x2000, scoped, tag = 'input window, operand 0']
    #allocation3 [shape = 's32[2]{0}', space=sflag, size = 0x8, scoped, tag = 'scoped memory for fullnet_nn_forward.1']
    #allocation4 [shape = 's32[2]{0}', space=sflag, size = 0x8, scoped, tag = 'scoped memory for fullnet_nn_forward.1']
    #allocation5 [shape = 'u8[327680]{0}', space=vmem, size = 0x50000, scoped, tag = 'input window, operand 1, single buffered']
    #allocation6 [shape = 's32[1]{0}', space=sflag, size = 0x4, scoped, tag = 'scoped memory for fullnet_nn_forward.1']
    #allocation7 [shape = 'u8[4096]{0}', space=vmem, size = 0x1000, scoped, tag = 'input window, operand 2, single buffered']
    #allocation8 [shape = 'u8[8192]{0}', space=vmem, size = 0x2000, scoped, tag = 'output window, operand 0']
    %8 = vsyncpa [#allocation3], 0
    %s9 = scalar_lea.sflag [#allocation3], 1
    %10 = vsyncpa %s9, 0
    %11 = vsyncpa [#allocation6], 0
    %12 = vsyncpa [#allocation4], 0
    %s13 = scalar_lea.sflag [#allocation4], 1
    %14 = vsyncpa %s13, 0
    loop: start=0, step=1, limit=4
    $region2: #{fullnet_nn_forward.1} parent=1 // loop_pre_header
      _
    $region3: #{fullnet_nn_forward.1} parent=1 // loop_header
      %s16 = sphi 0, %s20
      %p17 = scmp.ge.s32.totalorder %s16, 4
      %s26 = sphi 0, %s28
      %s29 = sphi 0, %s26
      %s30 = sphi 0, %s29
      %s46 = sphi 0, %s30
      %s50 = sphi 0, %s50
      %s52 = sphi 0, %s50
      %s53 = sphi 0, %s52
      %s67 = sphi 0, %s53
      %s71 = sphi 0, %s71
      %s73 = sphi 0, %s71
      %s74 = sphi 0, %s73
      %s88 = sphi 0, %s74
      %s94 = sphi 0, %s96
      %s97 = sphi 0, %s94
      %s98 = sphi 0, %s97
      %s114 = sphi 0, %s98
    $region4: #{fullnet_nn_forward.1} parent=1 // loop_header_branch
      %19 = sbr.rel (%p17) target = $region8
    $region5: #{fullnet_nn_forward.1} parent=1 // loop_body
      %s21 = ssub.s32 %s16, 1
      %s22 = ssub.s32 %s16, 2
      %s23 = sadd.s32 %s16, 1
      %s24 = ssub.s32 %s16, %s23
      %p25 = scmp.eq.s32.totalorder %s24, 0
      %s27 = sadd.s32 %s26, 1
      %s28 = scalar_select %p25, %s26, %s27
      %p31 = pneg %p25
      %p32 = scmp.eq.s32.totalorder %s16, 1
      %p33 = por %p31, %p32
      %p34 = scmp.ne.s32.totalorder %s26, %s29
      %p35 = scmp.eq.s32.totalorder %s16, 0
      %p36 = por %p34, %p35
      %p37 = scmp.ne.s32.totalorder %s26, %s29
      %p38 = scmp.eq.s32.totalorder %s21, 1
      %p39 = por %p37, %p38
      %p40 = scmp.ne.s32.totalorder %s29, %s30
      %p41 = scmp.eq.s32.totalorder %s21, 0
      %p42 = por %p40, %p41
      %p43 = scmp.ne.s32.totalorder %s29, %s30
      %p44 = scmp.eq.s32.totalorder %s22, 1
      %p45 = por %p43, %p44
      %p47 = scmp.ne.s32.totalorder %s30, %s46
      %p48 = scmp.eq.s32.totalorder %s22, 0
      %p49 = por %p47, %p48
      %s51 = sadd.s32 %s50, 1
      %p54 = scmp.eq.s32.totalorder %s16, 1
      %p55 = scmp.ne.s32.totalorder %s50, %s52
      %p56 = scmp.eq.s32.totalorder %s16, 0
      %p57 = por %p55, %p56
      %p58 = scmp.ne.s32.totalorder %s50, %s52
      %p59 = scmp.eq.s32.totalorder %s21, 1
      %p60 = por %p58, %p59
      %p61 = scmp.ne.s32.totalorder %s52, %s53
      %p62 = scmp.eq.s32.totalorder %s21, 0
      %p63 = por %p61, %p62
      %p64 = scmp.ne.s32.totalorder %s52, %s53
      %p65 = scmp.eq.s32.totalorder %s22, 1
      %p66 = por %p64, %p65
      %p68 = scmp.ne.s32.totalorder %s53, %s67
      %p69 = scmp.eq.s32.totalorder %s22, 0
      %p70 = por %p68, %p69
      %s72 = sadd.s32 %s71, 1
      %p75 = scmp.eq.s32.totalorder %s16, 1
      %p76 = scmp.ne.s32.totalorder %s71, %s73
      %p77 = scmp.eq.s32.totalorder %s16, 0
      %p78 = por %p76, %p77
      %p79 = scmp.ne.s32.totalorder %s71, %s73
      %p80 = scmp.eq.s32.totalorder %s21, 1
      %p81 = por %p79, %p80
      %p82 = scmp.ne.s32.totalorder %s73, %s74
      %p83 = scmp.eq.s32.totalorder %s21, 0
      %p84 = por %p82, %p83
      %p85 = scmp.ne.s32.totalorder %s73, %s74
      %p86 = scmp.eq.s32.totalorder %s22, 1
      %p87 = por %p85, %p86
      %p89 = scmp.ne.s32.totalorder %s74, %s88
      %p90 = scmp.eq.s32.totalorder %s22, 0
      %p91 = por %p89, %p90
      %s92 = ssub.s32 %s16, %s23
      %p93 = scmp.eq.s32.totalorder %s92, 0
      %s95 = sadd.s32 %s94, 1
      %s96 = scalar_select %p93, %s94, %s95
      %p99 = pneg %p93
      %p100 = scmp.eq.s32.totalorder %s16, 1
      %p101 = por %p99, %p100
      %p102 = scmp.ne.s32.totalorder %s94, %s97
      %p103 = scmp.eq.s32.totalorder %s16, 0
      %p104 = por %p102, %p103
      %p105 = scmp.ne.s32.totalorder %s94, %s97
      %p106 = scmp.eq.s32.totalorder %s21, 1
      %p107 = por %p105, %p106
      %p108 = scmp.ne.s32.totalorder %s97, %s98
      %p109 = scmp.eq.s32.totalorder %s21, 0
      %p110 = por %p108, %p109
      %p111 = scmp.ne.s32.totalorder %s97, %s98
      %p112 = scmp.eq.s32.totalorder %s22, 1
      %p113 = por %p111, %p112
      %p115 = scmp.ne.s32.totalorder %s98, %s114
      %p116 = scmp.eq.s32.totalorder %s22, 0
      %p117 = por %p115, %p116
      %p118 = scmp.le.s32.totalorder 1, %s16
      %p119 = scmp.lt.s32.totalorder %s16, 3
      %p120 = pnand %p118, %p119
      %p121 = pneg %p120
      // Predicated region
      $region9: #{fullnet_nn_forward.1} parent=5 // pred_check
        _
      $region10: #{fullnet_nn_forward.1} parent=5 // pred_check_branch
        %123 = sbr.rel (%p120) target = $region12
      $region11: #{fullnet_nn_forward.1} parent=5 // pred_region
        %s124 = ssub.s32 %s16, 1
        // Predicated region
        $region13: #{fullnet_nn_forward.1} parent=11 // pred_check
          %p125 = pneg %p63
        $region14: #{fullnet_nn_forward.1} parent=11 // pred_check_branch
          %127 = sbr.rel (%p125) target = $region16
        $region15: #{fullnet_nn_forward.1} parent=11 // pred_region
          %s129 = ssub.s32 10240, 10240
          %130 = vsyncadd [#allocation6], %s129
          %s131 = sshll.u32 [#allocation5], 4
          %s132 = int_to_ptr.vmem [resolvable:$true] %s131
          %137 = dma.hbm_to_vmem [thread:$0]  %s1, 10240, %s132, [#allocation6], 128, 128, 8
        $region16: #{fullnet_nn_forward.1} parent=11 // pred_fallthru
          _
        // Predicated region
        $region17: #{fullnet_nn_forward.1} parent=11 // pred_check
          %p138 = pneg %p84
        $region18: #{fullnet_nn_forward.1} parent=11 // pred_check_branch
          %140 = sbr.rel (%p138) target = $region20
        $region19: #{fullnet_nn_forward.1} parent=11 // pred_region
          %s142 = ssub.s32 128, 128
          %143 = vsyncadd [#allocation6], %s142
          %s145 = sshll.u32 [#allocation7], 4
          %s146 = int_to_ptr.vmem [resolvable:$true] %s145
          %148 = dma.hbm_to_vmem [thread:$0]  %s2, 128, %s146, [#allocation6]
        $region20: #{fullnet_nn_forward.1} parent=11 // pred_fallthru
          _
      $region12: #{fullnet_nn_forward.1} parent=5 // pred_fallthru
        _
      %p149 = scmp.lt.s32.totalorder %s16, 2
      // Predicated region
      $region21: #{fullnet_nn_forward.1} parent=5 // pred_check
        %p150 = pneg %p149
      $region22: #{fullnet_nn_forward.1} parent=5 // pred_check_branch
        %152 = sbr.rel (%p150) target = $region24
      $region23: #{fullnet_nn_forward.1} parent=5 // pred_region
        // Predicated region
        $region25: #{fullnet_nn_forward.1} parent=23 // pred_check
          %p153 = pneg %p36
        $region26: #{fullnet_nn_forward.1} parent=23 // pred_check_branch
          %155 = sbr.rel (%p153) target = $region28
        $region27: #{fullnet_nn_forward.1} parent=23 // pred_region
          %s156 = sand.u32 %s26, 1
          %s157 = scalar_lea.sflag [#allocation3], %s156
          %s158 = sand.u32 %s26, 1
          %s159 = smul.addr %s158, 8
          %s160 = scalar_lea.vmem [#allocation2], %s159
          %s162 = ssub.s32 128, 128
          %163 = vsyncadd %s157, %s162
          %s164 = smul.addr %s16, 128
          %s165 = scalar_lea.hbm %s0, %s164
          %s167 = sshll.u32 %s160, 4
          %s168 = int_to_ptr.vmem [resolvable:$true] %s167
          %170 = dma.hbm_to_vmem [thread:$0]  %s165, 128, %s168, %s157
        $region28: #{fullnet_nn_forward.1} parent=23 // pred_fallthru
          _
      $region24: #{fullnet_nn_forward.1} parent=5 // pred_fallthru
        _
      %p171 = scmp.le.s32.totalorder 1, %s16
      %p172 = scmp.lt.s32.totalorder %s16, 3
      %p173 = pnand %p171, %p172
      %p174 = pneg %p173
      // Predicated region
      $region29: #{fullnet_nn_forward.1} parent=5 // pred_check
        _
      $region30: #{fullnet_nn_forward.1} parent=5 // pred_check_branch
        %176 = sbr.rel (%p173) target = $region32
      $region31: #{fullnet_nn_forward.1} parent=5 // pred_region
        %s177 = ssub.s32 %s16, 1
        %s178 = sand.u32 %s29, 1
        %s179 = scalar_lea.sflag [#allocation3], %s178
        %s180 = sand.u32 %s29, 1
        %s181 = smul.addr %s180, 8
        %s182 = scalar_lea.vmem [#allocation2], %s181
        // Predicated region
        $region33: #{fullnet_nn_forward.1} parent=31 // pred_check
          %p183 = pneg %p42
        $region34: #{fullnet_nn_forward.1} parent=31 // pred_check_branch
          %185 = sbr.rel (%p183) target = $region36
        $region35: #{fullnet_nn_forward.1} parent=31 // pred_region
          %186 = dma.done %s179, 128
        $region36: #{fullnet_nn_forward.1} parent=31 // pred_fallthru
          _
        // Predicated region
        $region37: #{fullnet_nn_forward.1} parent=31 // pred_check
          %p187 = pneg %p63
        $region38: #{fullnet_nn_forward.1} parent=31 // pred_check_branch
          %189 = sbr.rel (%p187) target = $region40
        $region39: #{fullnet_nn_forward.1} parent=31 // pred_region
          %190 = dma.done [#allocation6], 10240
        $region40: #{fullnet_nn_forward.1} parent=31 // pred_fallthru
          _
        // Predicated region
        $region41: #{fullnet_nn_forward.1} parent=31 // pred_check
          %p191 = pneg %p84
        $region42: #{fullnet_nn_forward.1} parent=31 // pred_check_branch
          %193 = sbr.rel (%p191) target = $region44
        $region43: #{fullnet_nn_forward.1} parent=31 // pred_region
          %194 = dma.done [#allocation6], 128
        $region44: #{fullnet_nn_forward.1} parent=31 // pred_fallthru
          _
        %s195 = sand.u32 %s29, 1
        %s196 = scalar_lea.sflag [#allocation3], %s195
        %s197 = sand.u32 %s29, 1
        %s198 = smul.addr %s197, 8
        %s199 = scalar_lea.vmem [#allocation2], %s198
        %p200 = pneg %p42
        %p201 = pneg %p39
        %p202 = pneg %p63
        %p203 = pneg %p60
        %p204 = pneg %p84
        %p205 = pneg %p81
        %p206 = pneg %p110
        %p207 = pneg %p107
        %s208 = sand.u32 %s97, 1
        %s209 = scalar_lea.sflag [#allocation4], %s208
        %s210 = sand.u32 %s97, 1
        %s211 = smul.addr %s210, 8
        %s212 = scalar_lea.vmem [#allocation8], %s211
        %v213 = vld [vmem:[%s182] sm:$0xff]
        %v214 = vld [vmem:[#allocation5] sm:$0xff]
        %v215 = vld [vmem:[#allocation5 + $0x8] sm:$0xff]
        %v216 = vld [vmem:[#allocation5 + $0x10] sm:$0xff]
        %v217 = vld [vmem:[#allocation5 + $0x18] sm:$0xff]
        %v218 = vld [vmem:[#allocation7] sm:$0x1]
        %v219 = vlaneseq
        %v220 = vshrl.u32 %v219, 7
        %v221 = vsub.s32 0, %v220
        %v222 = vrot.slane %v218, %v221
        %vm223 = vcmask 261120
        %v225 = vsel %vm223, %v213, 0
        %227 = vmatprep.subr.mxu0 0.0
        %228 = vmatpush1.msra.mxu0 0.0
        %229 = vmatprep.subr.mxu0 0.0
        %230 = vmatpush1.msra.mxu0 0.0
        %231 = vmatprep.subr.mxu0 0.0
        %232 = vmatpush1.msra.mxu0 0.0
        %233 = vmatprep.subr.mxu0 0.0
        %234 = vmatpush1.msra.mxu0 0.0
        %235 = vmatprep.subr.mxu0 0.0
        %236 = vmatpush1.msra.mxu0 0.0
        %237 = vmatprep.subr.mxu0 0.0
        %238 = vmatpush1.msra.mxu0 0.0
        %239 = vmatprep.subr.mxu0 0.0
        %240 = vmatpush1.msra.mxu0 0.0
        %241 = vmatprep.subr.mxu0 0.0
        %242 = vmatpush1.msra.mxu0 0.0
        %243 = vmatprep.subr.mxu0 0.0
        %244 = vmatpush1.msra.mxu0 0.0
        %245 = vmatprep.subr.mxu0 0.0
        %246 = vmatpush1.msra.mxu0 0.0
        %247 = vmatprep.subr.mxu0 0.0
        %248 = vmatpush1.msra.mxu0 0.0
        %249 = vmatprep.subr.mxu0 0.0
        %250 = vmatpush1.msra.mxu0 0.0
        %251 = vmatprep.subr.mxu0 0.0
        %252 = vmatpush1.msra.mxu0 %v217
        %253 = vmatprep.subr.mxu0 0.0
        %254 = vmatpush1.msra.mxu0 %v216
        %255 = vmatprep.subr.mxu0 0.0
        %256 = vmatpush1.msra.mxu0 %v215
        %257 = vmatprep.subr.mxu0 0.0
        %258 = vmatpush1.msra.mxu0 %v214
        %259 = vmatprep.subr.mxu0 0.0
        %260 = vmatpush2.msra.mxu0 0.0
        %261 = vmatprep.subr.mxu0 0.0
        %262 = vmatpush2.msra.mxu0 0.0
        %263 = vmatprep.subr.mxu0 0.0
        %264 = vmatpush2.msra.mxu0 0.0
        %265 = vmatprep.subr.mxu0 0.0
        %266 = vmatpush2.msra.mxu0 0.0
        %267 = vmatprep.subr.mxu0 0.0
        %268 = vmatpush2.msra.mxu0 0.0
        %269 = vmatprep.subr.mxu0 0.0
        %270 = vmatpush2.msra.mxu0 0.0
        %271 = vmatprep.subr.mxu0 0.0
        %272 = vmatpush2.msra.mxu0 0.0
        %273 = vmatprep.subr.mxu0 0.0
        %274 = vmatpush2.msra.mxu0 0.0
        %275 = vmatprep.subr.mxu0 0.0
        %276 = vmatpush2.msra.mxu0 0.0
        %277 = vmatprep.subr.mxu0 0.0
        %278 = vmatpush2.msra.mxu0 0.0
        %279 = vmatprep.subr.mxu0 0.0
        %280 = vmatpush2.msra.mxu0 0.0
        %281 = vmatprep.subr.mxu0 0.0
        %282 = vmatpush2.msra.mxu0 0.0
        %283 = vmatprep.subr.mxu0 0.0
        %284 = vmatpush2.msra.mxu0 0.0
        %285 = vmatprep.subr.mxu0 0.0
        %286 = vmatpush2.msra.mxu0 0.0
        %287 = vmatprep.subr.mxu0 0.0
        %288 = vmatpush2.msra.mxu0 0.0
        %289 = vmatprep.subr.mxu0 0.0
        %290 = vmatpush2.msra.mxu0 0.0
        %291 = vmatprep.mubr.f32.mxu0 0.0
        %292 = vmatmul.mubr.f32.gmra.mxu0 %v225
        %v293 = vpop.f32.mrf.mxu0
        %v294 = vadd.f32 %v222, %v293
        %v295 = vpop.f32.mrf.mxu0
        %296 = vdwg.mxu0
        %v297 = vmax.f32 %v294, 0.0
        %s298 = scalar_lea.vmem [#allocation5], 128
        %v299 = vld [vmem:[%s298] sm:$0xff]
        %v300 = vld [vmem:[%s298 + $0x8] sm:$0xff]
        %v301 = vld [vmem:[%s298 + $0x10] sm:$0xff]
        %v302 = vld [vmem:[%s298 + $0x18] sm:$0xff]
        %v303 = vld [vmem:[%s298 + $0x20] sm:$0xff]
        %v304 = vld [vmem:[%s298 + $0x28] sm:$0xff]
        %v305 = vld [vmem:[%s298 + $0x30] sm:$0xff]
        %v306 = vld [vmem:[%s298 + $0x38] sm:$0xff]
        %v307 = vld [vmem:[%s298 + $0x40] sm:$0xff]
        %v308 = vld [vmem:[%s298 + $0x48] sm:$0xff]
        %v309 = vld [vmem:[%s298 + $0x50] sm:$0xff]
        %v310 = vld [vmem:[%s298 + $0x58] sm:$0xff]
        %v311 = vld [vmem:[%s298 + $0x60] sm:$0xff]
        %v312 = vld [vmem:[%s298 + $0x68] sm:$0xff]
        %v313 = vld [vmem:[%s298 + $0x70] sm:$0xff]
        %v314 = vld [vmem:[%s298 + $0x78] sm:$0xff]
        %v315 = vld [vmem:[#allocation7 + $0x1] sm:$0x1]
        %v316 = vlaneseq
        %v317 = vshrl.u32 %v316, 7
        %v318 = vsub.s32 0, %v317
        %v319 = vrot.slane %v315, %v318
        %320 = vmatprep.subr.mxu0 0.0
        %321 = vmatpush1.msra.mxu0 %v314
        %322 = vmatprep.subr.mxu0 0.0
        %323 = vmatpush1.msra.mxu0 %v313
        %324 = vmatprep.subr.mxu0 0.0
        %325 = vmatpush1.msra.mxu0 %v312
        %326 = vmatprep.subr.mxu0 0.0
        %327 = vmatpush1.msra.mxu0 %v311
        %328 = vmatprep.subr.mxu0 0.0
        %329 = vmatpush1.msra.mxu0 %v310
        %330 = vmatprep.subr.mxu0 0.0
        %331 = vmatpush1.msra.mxu0 %v309
        %332 = vmatprep.subr.mxu0 0.0
        %333 = vmatpush1.msra.mxu0 %v308
        %334 = vmatprep.subr.mxu0 0.0
        %335 = vmatpush1.msra.mxu0 %v307
        %336 = vmatprep.subr.mxu0 0.0
        %337 = vmatpush1.msra.mxu0 %v306
        %338 = vmatprep.subr.mxu0 0.0
        %339 = vmatpush1.msra.mxu0 %v305
        %340 = vmatprep.subr.mxu0 0.0
        %341 = vmatpush1.msra.mxu0 %v304
        %342 = vmatprep.subr.mxu0 0.0
        %343 = vmatpush1.msra.mxu0 %v303
        %344 = vmatprep.subr.mxu0 0.0
        %345 = vmatpush1.msra.mxu0 %v302
        %346 = vmatprep.subr.mxu0 0.0
        %347 = vmatpush1.msra.mxu0 %v301
        %348 = vmatprep.subr.mxu0 0.0
        %349 = vmatpush1.msra.mxu0 %v300
        %350 = vmatprep.subr.mxu0 0.0
        %351 = vmatpush1.msra.mxu0 %v299
        %352 = vmatprep.subr.mxu0 0.0
        %353 = vmatpush2.msra.mxu0 0.0
        %354 = vmatprep.subr.mxu0 0.0
        %355 = vmatpush2.msra.mxu0 0.0
        %356 = vmatprep.subr.mxu0 0.0
        %357 = vmatpush2.msra.mxu0 0.0
        %358 = vmatprep.subr.mxu0 0.0
        %359 = vmatpush2.msra.mxu0 0.0
        %360 = vmatprep.subr.mxu0 0.0
        %361 = vmatpush2.msra.mxu0 0.0
        %362 = vmatprep.subr.mxu0 0.0
        %363 = vmatpush2.msra.mxu0 0.0
        %364 = vmatprep.subr.mxu0 0.0
        %365 = vmatpush2.msra.mxu0 0.0
        %366 = vmatprep.subr.mxu0 0.0
        %367 = vmatpush2.msra.mxu0 0.0
        %368 = vmatprep.subr.mxu0 0.0
        %369 = vmatpush2.msra.mxu0 0.0
        %370 = vmatprep.subr.mxu0 0.0
        %371 = vmatpush2.msra.mxu0 0.0
        %372 = vmatprep.subr.mxu0 0.0
        %373 = vmatpush2.msra.mxu0 0.0
        %374 = vmatprep.subr.mxu0 0.0
        %375 = vmatpush2.msra.mxu0 0.0
        %376 = vmatprep.subr.mxu0 0.0
        %377 = vmatpush2.msra.mxu0 0.0
        %378 = vmatprep.subr.mxu0 0.0
        %379 = vmatpush2.msra.mxu0 0.0
        %380 = vmatprep.subr.mxu0 0.0
        %381 = vmatpush2.msra.mxu0 0.0
        %382 = vmatprep.subr.mxu0 0.0
        %383 = vmatpush2.msra.mxu0 0.0
        %384 = vmatprep.mubr.f32.mxu0 0.0
        %385 = vmatmul.mubr.f32.gmra.mxu0 %v297
        %v386 = vpop.f32.mrf.mxu0
        %v387 = vadd.f32 %v319, %v386
        %v388 = vpop.f32.mrf.mxu0
        %389 = vdwg.mxu0
        %v390 = vmax.f32 %v387, 0.0
        %s391 = scalar_lea.vmem [#allocation5], 256
        %v392 = vld [vmem:[%s391] sm:$0xff]
        %v393 = vld [vmem:[%s391 + $0x8] sm:$0xff]
        %v394 = vld [vmem:[%s391 + $0x10] sm:$0xff]
        %v395 = vld [vmem:[%s391 + $0x18] sm:$0xff]
        %v396 = vld [vmem:[%s391 + $0x20] sm:$0xff]
        %v397 = vld [vmem:[%s391 + $0x28] sm:$0xff]
        %v398 = vld [vmem:[%s391 + $0x30] sm:$0xff]
        %v399 = vld [vmem:[%s391 + $0x38] sm:$0xff]
        %v400 = vld [vmem:[%s391 + $0x40] sm:$0xff]
        %v401 = vld [vmem:[%s391 + $0x48] sm:$0xff]
        %v402 = vld [vmem:[%s391 + $0x50] sm:$0xff]
        %v403 = vld [vmem:[%s391 + $0x58] sm:$0xff]
        %v404 = vld [vmem:[%s391 + $0x60] sm:$0xff]
        %v405 = vld [vmem:[%s391 + $0x68] sm:$0xff]
        %v406 = vld [vmem:[%s391 + $0x70] sm:$0xff]
        %v407 = vld [vmem:[%s391 + $0x78] sm:$0xff]
        %v408 = vld [vmem:[#allocation7 + $0x2] sm:$0x1]
        %v409 = vlaneseq
        %v410 = vshrl.u32 %v409, 7
        %v411 = vsub.s32 0, %v410
        %v412 = vrot.slane %v408, %v411
        %413 = vmatprep.subr.mxu0 0.0
        %414 = vmatpush1.msra.mxu0 %v407
        %415 = vmatprep.subr.mxu0 0.0
        %416 = vmatpush1.msra.mxu0 %v406
        %417 = vmatprep.subr.mxu0 0.0
        %418 = vmatpush1.msra.mxu0 %v405
        %419 = vmatprep.subr.mxu0 0.0
        %420 = vmatpush1.msra.mxu0 %v404
        %421 = vmatprep.subr.mxu0 0.0
        %422 = vmatpush1.msra.mxu0 %v403
        %423 = vmatprep.subr.mxu0 0.0
        %424 = vmatpush1.msra.mxu0 %v402
        %425 = vmatprep.subr.mxu0 0.0
        %426 = vmatpush1.msra.mxu0 %v401
        %427 = vmatprep.subr.mxu0 0.0
        %428 = vmatpush1.msra.mxu0 %v400
        %429 = vmatprep.subr.mxu0 0.0
        %430 = vmatpush1.msra.mxu0 %v399
        %431 = vmatprep.subr.mxu0 0.0
        %432 = vmatpush1.msra.mxu0 %v398
        %433 = vmatprep.subr.mxu0 0.0
        %434 = vmatpush1.msra.mxu0 %v397
        %435 = vmatprep.subr.mxu0 0.0
        %436 = vmatpush1.msra.mxu0 %v396
        %437 = vmatprep.subr.mxu0 0.0
        %438 = vmatpush1.msra.mxu0 %v395
        %439 = vmatprep.subr.mxu0 0.0
        %440 = vmatpush1.msra.mxu0 %v394
        %441 = vmatprep.subr.mxu0 0.0
        %442 = vmatpush1.msra.mxu0 %v393
        %443 = vmatprep.subr.mxu0 0.0
        %444 = vmatpush1.msra.mxu0 %v392
        %445 = vmatprep.subr.mxu0 0.0
        %446 = vmatpush2.msra.mxu0 0.0
        %447 = vmatprep.subr.mxu0 0.0
        %448 = vmatpush2.msra.mxu0 0.0
        %449 = vmatprep.subr.mxu0 0.0
        %450 = vmatpush2.msra.mxu0 0.0
        %451 = vmatprep.subr.mxu0 0.0
        %452 = vmatpush2.msra.mxu0 0.0
        %453 = vmatprep.subr.mxu0 0.0
        %454 = vmatpush2.msra.mxu0 0.0
        %455 = vmatprep.subr.mxu0 0.0
        %456 = vmatpush2.msra.mxu0 0.0
        %457 = vmatprep.subr.mxu0 0.0
        %458 = vmatpush2.msra.mxu0 0.0
        %459 = vmatprep.subr.mxu0 0.0
        %460 = vmatpush2.msra.mxu0 0.0
        %461 = vmatprep.subr.mxu0 0.0
        %462 = vmatpush2.msra.mxu0 0.0
        %463 = vmatprep.subr.mxu0 0.0
        %464 = vmatpush2.msra.mxu0 0.0
        %465 = vmatprep.subr.mxu0 0.0
        %466 = vmatpush2.msra.mxu0 0.0
        %467 = vmatprep.subr.mxu0 0.0
        %468 = vmatpush2.msra.mxu0 0.0
        %469 = vmatprep.subr.mxu0 0.0
        %470 = vmatpush2.msra.mxu0 0.0
        %471 = vmatprep.subr.mxu0 0.0
        %472 = vmatpush2.msra.mxu0 0.0
        %473 = vmatprep.subr.mxu0 0.0
        %474 = vmatpush2.msra.mxu0 0.0
        %475 = vmatprep.subr.mxu0 0.0
        %476 = vmatpush2.msra.mxu0 0.0
        %477 = vmatprep.mubr.f32.mxu0 0.0
        %478 = vmatmul.mubr.f32.gmra.mxu0 %v390
        %v479 = vpop.f32.mrf.mxu0
        %v480 = vadd.f32 %v412, %v479
        %v481 = vpop.f32.mrf.mxu0
        %482 = vdwg.mxu0
        %v483 = vmax.f32 %v480, 0.0
        %s484 = scalar_lea.vmem [#allocation5], 384
        %v485 = vld [vmem:[%s484] sm:$0xff]
        %v486 = vld [vmem:[%s484 + $0x8] sm:$0xff]
        %v487 = vld [vmem:[%s484 + $0x10] sm:$0xff]
        %v488 = vld [vmem:[%s484 + $0x18] sm:$0xff]
        %v489 = vld [vmem:[%s484 + $0x20] sm:$0xff]
        %v490 = vld [vmem:[%s484 + $0x28] sm:$0xff]
        %v491 = vld [vmem:[%s484 + $0x30] sm:$0xff]
        %v492 = vld [vmem:[%s484 + $0x38] sm:$0xff]
        %v493 = vld [vmem:[%s484 + $0x40] sm:$0xff]
        %v494 = vld [vmem:[%s484 + $0x48] sm:$0xff]
        %v495 = vld [vmem:[%s484 + $0x50] sm:$0xff]
        %v496 = vld [vmem:[%s484 + $0x58] sm:$0xff]
        %v497 = vld [vmem:[%s484 + $0x60] sm:$0xff]
        %v498 = vld [vmem:[%s484 + $0x68] sm:$0xff]
        %v499 = vld [vmem:[%s484 + $0x70] sm:$0xff]
        %v500 = vld [vmem:[%s484 + $0x78] sm:$0xff]
        %v501 = vld [vmem:[#allocation7 + $0x3] sm:$0x1]
        %v502 = vlaneseq
        %v503 = vshrl.u32 %v502, 7
        %v504 = vsub.s32 0, %v503
        %v505 = vrot.slane %v501, %v504
        %506 = vmatprep.subr.mxu0 0.0
        %507 = vmatpush1.msra.mxu0 %v500
        %508 = vmatprep.subr.mxu0 0.0
        %509 = vmatpush1.msra.mxu0 %v499
        %510 = vmatprep.subr.mxu0 0.0
        %511 = vmatpush1.msra.mxu0 %v498
        %512 = vmatprep.subr.mxu0 0.0
        %513 = vmatpush1.msra.mxu0 %v497
        %514 = vmatprep.subr.mxu0 0.0
        %515 = vmatpush1.msra.mxu0 %v496
        %516 = vmatprep.subr.mxu0 0.0
        %517 = vmatpush1.msra.mxu0 %v495
        %518 = vmatprep.subr.mxu0 0.0
        %519 = vmatpush1.msra.mxu0 %v494
        %520 = vmatprep.subr.mxu0 0.0
        %521 = vmatpush1.msra.mxu0 %v493
        %522 = vmatprep.subr.mxu0 0.0
        %523 = vmatpush1.msra.mxu0 %v492
        %524 = vmatprep.subr.mxu0 0.0
        %525 = vmatpush1.msra.mxu0 %v491
        %526 = vmatprep.subr.mxu0 0.0
        %527 = vmatpush1.msra.mxu0 %v490
        %528 = vmatprep.subr.mxu0 0.0
        %529 = vmatpush1.msra.mxu0 %v489
        %530 = vmatprep.subr.mxu0 0.0
        %531 = vmatpush1.msra.mxu0 %v488
        %532 = vmatprep.subr.mxu0 0.0
        %533 = vmatpush1.msra.mxu0 %v487
        %534 = vmatprep.subr.mxu0 0.0
        %535 = vmatpush1.msra.mxu0 %v486
        %536 = vmatprep.subr.mxu0 0.0
        %537 = vmatpush1.msra.mxu0 %v485
        %538 = vmatprep.subr.mxu0 0.0
        %539 = vmatpush2.msra.mxu0 0.0
        %540 = vmatprep.subr.mxu0 0.0
        %541 = vmatpush2.msra.mxu0 0.0
        %542 = vmatprep.subr.mxu0 0.0
        %543 = vmatpush2.msra.mxu0 0.0
        %544 = vmatprep.subr.mxu0 0.0
        %545 = vmatpush2.msra.mxu0 0.0
        %546 = vmatprep.subr.mxu0 0.0
        %547 = vmatpush2.msra.mxu0 0.0
        %548 = vmatprep.subr.mxu0 0.0
        %549 = vmatpush2.msra.mxu0 0.0
        %550 = vmatprep.subr.mxu0 0.0
        %551 = vmatpush2.msra.mxu0 0.0
        %552 = vmatprep.subr.mxu0 0.0
        %553 = vmatpush2.msra.mxu0 0.0
        %554 = vmatprep.subr.mxu0 0.0
        %555 = vmatpush2.msra.mxu0 0.0
        %556 = vmatprep.subr.mxu0 0.0
        %557 = vmatpush2.msra.mxu0 0.0
        %558 = vmatprep.subr.mxu0 0.0
        %559 = vmatpush2.msra.mxu0 0.0
        %560 = vmatprep.subr.mxu0 0.0
        %561 = vmatpush2.msra.mxu0 0.0
        %562 = vmatprep.subr.mxu0 0.0
        %563 = vmatpush2.msra.mxu0 0.0
        %564 = vmatprep.subr.mxu0 0.0
        %565 = vmatpush2.msra.mxu0 0.0
        %566 = vmatprep.subr.mxu0 0.0
        %567 = vmatpush2.msra.mxu0 0.0
        %568 = vmatprep.subr.mxu0 0.0
        %569 = vmatpush2.msra.mxu0 0.0
        %570 = vmatprep.mubr.f32.mxu0 0.0
        %571 = vmatmul.mubr.f32.gmra.mxu0 %v483
        %v572 = vpop.f32.mrf.mxu0
        %v573 = vadd.f32 %v505, %v572
        %v574 = vpop.f32.mrf.mxu0
        %575 = vdwg.mxu0
        %v576 = vmax.f32 %v573, 0.0
        %s577 = scalar_lea.vmem [#allocation5], 512
        %v578 = vld [vmem:[%s577] sm:$0xff]
        %v579 = vld [vmem:[%s577 + $0x8] sm:$0xff]
        %v580 = vld [vmem:[%s577 + $0x10] sm:$0xff]
        %v581 = vld [vmem:[%s577 + $0x18] sm:$0xff]
        %v582 = vld [vmem:[%s577 + $0x20] sm:$0xff]
        %v583 = vld [vmem:[%s577 + $0x28] sm:$0xff]
        %v584 = vld [vmem:[%s577 + $0x30] sm:$0xff]
        %v585 = vld [vmem:[%s577 + $0x38] sm:$0xff]
        %v586 = vld [vmem:[%s577 + $0x40] sm:$0xff]
        %v587 = vld [vmem:[%s577 + $0x48] sm:$0xff]
        %v588 = vld [vmem:[%s577 + $0x50] sm:$0xff]
        %v589 = vld [vmem:[%s577 + $0x58] sm:$0xff]
        %v590 = vld [vmem:[%s577 + $0x60] sm:$0xff]
        %v591 = vld [vmem:[%s577 + $0x68] sm:$0xff]
        %v592 = vld [vmem:[%s577 + $0x70] sm:$0xff]
        %v593 = vld [vmem:[%s577 + $0x78] sm:$0xff]
        %v594 = vld [vmem:[#allocation7 + $0x4] sm:$0x1]
        %v595 = vlaneseq
        %v596 = vshrl.u32 %v595, 7
        %v597 = vsub.s32 0, %v596
        %v598 = vrot.slane %v594, %v597
        %599 = vmatprep.subr.mxu0 0.0
        %600 = vmatpush1.msra.mxu0 %v593
        %601 = vmatprep.subr.mxu0 0.0
        %602 = vmatpush1.msra.mxu0 %v592
        %603 = vmatprep.subr.mxu0 0.0
        %604 = vmatpush1.msra.mxu0 %v591
        %605 = vmatprep.subr.mxu0 0.0
        %606 = vmatpush1.msra.mxu0 %v590
        %607 = vmatprep.subr.mxu0 0.0
        %608 = vmatpush1.msra.mxu0 %v589
        %609 = vmatprep.subr.mxu0 0.0
        %610 = vmatpush1.msra.mxu0 %v588
        %611 = vmatprep.subr.mxu0 0.0
        %612 = vmatpush1.msra.mxu0 %v587
        %613 = vmatprep.subr.mxu0 0.0
        %614 = vmatpush1.msra.mxu0 %v586
        %615 = vmatprep.subr.mxu0 0.0
        %616 = vmatpush1.msra.mxu0 %v585
        %617 = vmatprep.subr.mxu0 0.0
        %618 = vmatpush1.msra.mxu0 %v584
        %619 = vmatprep.subr.mxu0 0.0
        %620 = vmatpush1.msra.mxu0 %v583
        %621 = vmatprep.subr.mxu0 0.0
        %622 = vmatpush1.msra.mxu0 %v582
        %623 = vmatprep.subr.mxu0 0.0
        %624 = vmatpush1.msra.mxu0 %v581
        %625 = vmatprep.subr.mxu0 0.0
        %626 = vmatpush1.msra.mxu0 %v580
        %627 = vmatprep.subr.mxu0 0.0
        %628 = vmatpush1.msra.mxu0 %v579
        %629 = vmatprep.subr.mxu0 0.0
        %630 = vmatpush1.msra.mxu0 %v578
        %631 = vmatprep.subr.mxu0 0.0
        %632 = vmatpush2.msra.mxu0 0.0
        %633 = vmatprep.subr.mxu0 0.0
        %634 = vmatpush2.msra.mxu0 0.0
        %635 = vmatprep.subr.mxu0 0.0
        %636 = vmatpush2.msra.mxu0 0.0
        %637 = vmatprep.subr.mxu0 0.0
        %638 = vmatpush2.msra.mxu0 0.0
        %639 = vmatprep.subr.mxu0 0.0
        %640 = vmatpush2.msra.mxu0 0.0
        %641 = vmatprep.subr.mxu0 0.0
        %642 = vmatpush2.msra.mxu0 0.0
        %643 = vmatprep.subr.mxu0 0.0
        %644 = vmatpush2.msra.mxu0 0.0
        %645 = vmatprep.subr.mxu0 0.0
        %646 = vmatpush2.msra.mxu0 0.0
        %647 = vmatprep.subr.mxu0 0.0
        %648 = vmatpush2.msra.mxu0 0.0
        %649 = vmatprep.subr.mxu0 0.0
        %650 = vmatpush2.msra.mxu0 0.0
        %651 = vmatprep.subr.mxu0 0.0
        %652 = vmatpush2.msra.mxu0 0.0
        %653 = vmatprep.subr.mxu0 0.0
        %654 = vmatpush2.msra.mxu0 0.0
        %655 = vmatprep.subr.mxu0 0.0
        %656 = vmatpush2.msra.mxu0 0.0
        %657 = vmatprep.subr.mxu0 0.0
        %658 = vmatpush2.msra.mxu0 0.0
        %659 = vmatprep.subr.mxu0 0.0
        %660 = vmatpush2.msra.mxu0 0.0
        %661 = vmatprep.subr.mxu0 0.0
        %662 = vmatpush2.msra.mxu0 0.0
        %663 = vmatprep.mubr.f32.mxu0 0.0
        %664 = vmatmul.mubr.f32.gmra.mxu0 %v576
        %v665 = vpop.f32.mrf.mxu0
        %v666 = vadd.f32 %v598, %v665
        %v667 = vpop.f32.mrf.mxu0
        %668 = vdwg.mxu0
        %vm669 = vcmask 130048
        %670 = vst.msk [vmem:[%s212] sm:$0xff] %vm669, %v666
        %s671 = sand.u32 %s97, 1
        %s672 = scalar_lea.sflag [#allocation4], %s671
        %s673 = sand.u32 %s97, 1
        %s674 = smul.addr %s673, 8
        %s675 = scalar_lea.vmem [#allocation8], %s674
        // Predicated region
        $region45: #{fullnet_nn_forward.1} parent=31 // pred_check
          %p676 = pneg %p107
        $region46: #{fullnet_nn_forward.1} parent=31 // pred_check_branch
          %678 = sbr.rel (%p676) target = $region48
        $region47: #{fullnet_nn_forward.1} parent=31 // pred_region
          %s680 = ssub.s32 128, 128
          %681 = vsyncadd %s672, %s680
          %s682 = smul.addr %s21, 128
          %s683 = scalar_lea.hbm %s3, %s682
          %s685 = sshll.u32 %s675, 4
          %s686 = int_to_ptr.vmem [resolvable:$true] %s685
          %688 = dma.vmem_to_hbm [thread:$0]  %s686, 128, %s683, %s672
        $region48: #{fullnet_nn_forward.1} parent=31 // pred_fallthru
          _
      $region32: #{fullnet_nn_forward.1} parent=5 // pred_fallthru
        _
      %p689 = scmp.le.s32.totalorder 2, %s16
      // Predicated region
      $region49: #{fullnet_nn_forward.1} parent=5 // pred_check
        %p690 = pneg %p689
      $region50: #{fullnet_nn_forward.1} parent=5 // pred_check_branch
        %692 = sbr.rel (%p690) target = $region52
      $region51: #{fullnet_nn_forward.1} parent=5 // pred_region
        %s693 = ssub.s32 %s16, 2
        // Predicated region
        $region53: #{fullnet_nn_forward.1} parent=51 // pred_check
          %p694 = pneg %p113
        $region54: #{fullnet_nn_forward.1} parent=51 // pred_check_branch
          %696 = sbr.rel (%p694) target = $region56
        $region55: #{fullnet_nn_forward.1} parent=51 // pred_region
          %s697 = sand.u32 %s98, 1
          %s698 = scalar_lea.sflag [#allocation4], %s697
          %s699 = sand.u32 %s98, 1
          %s700 = smul.addr %s699, 8
          %s701 = scalar_lea.vmem [#allocation8], %s700
          %702 = dma.done %s698, 128
        $region56: #{fullnet_nn_forward.1} parent=51 // pred_fallthru
          _
      $region52: #{fullnet_nn_forward.1} parent=5 // pred_fallthru
        _
    $region6: #{fullnet_nn_forward.1} parent=1 // loop_footer
      %s20 = sadd.s32 1, %s16
    $region7: #{fullnet_nn_forward.1} parent=1 // loop_footer_branch
      %15 = sbr.rel target = $region3
    $region8: #{fullnet_nn_forward.1} parent=1 // loop_exit
      _
    %703 = vsyncpa [#allocation3], 1
    %s704 = scalar_lea.sflag [#allocation3], 1
    %705 = vsyncpa %s704, 1
    %706 = vsyncpa [#allocation6], 1
    %707 = vsyncpa [#allocation4], 1
    %s708 = scalar_lea.sflag [#allocation4], 1
    %709 = vsyncpa %s708, 1

</llo_original>
